<compile_context>
chip_gen: v6e
topology: v6e:2x2x1
jax: 0.10.0
libtpu: 0.0.40
codegen_flags: <defaults>
</compile_context>

<pallas_src>
import functools
import math

import jax
import jax.numpy as jnp
from jax import lax
from jax.experimental import pallas as pl
from jax.experimental.pallas import tpu as pltpu

EPS = 1e-5
_MiB = 1024 * 1024


def _layernorm(h, gamma, beta):
    # f32 statistics.
    mu = jnp.mean(h, axis=-1, keepdims=True)
    var = jnp.mean((h - mu) ** 2, axis=-1, keepdims=True)
    return (h - mu) * lax.rsqrt(var + EPS) * gamma + beta


def _const_spec(shape):
    """Spec for weights/biases: constant block index -> single-buffered."""
    index_map = lambda b, i: (0,) * len(shape)
    try:
        return pl.BlockSpec(shape, index_map, pipeline_mode=pl.Buffered(1))
    except Exception:  # older jax without pipeline_mode support
        return pl.BlockSpec(shape, index_map)


def _seq_spec(tile, d):
    """Per-(batch, seq-block) spec for a [B, S, D] activation."""
    return pl.BlockSpec((1, tile, d), lambda b, i: (b, i, 0))


# --------------------------------------------------------------------------
# Prologue kernel: x2 = LN1(x + pos); Q (pre-scaled), K, V projections (bf16).
# --------------------------------------------------------------------------
def _ln1_qkv_kernel(x_ref, pos_ref, g_ref, b_ref,
                    wq_ref, bq_ref, wk_ref, bk_ref, wv_ref, bv_ref,
                    q_ref, k_ref, v_ref, *, scale):
    x2 = _layernorm(x_ref[0] + pos_ref[0], g_ref[0], b_ref[0]).astype(jnp.bfloat16)
    q = (jnp.dot(x2, wq_ref[...], preferred_element_type=jnp.float32)
         + bq_ref[0]) * scale
    k = jnp.dot(x2, wk_ref[...], preferred_element_type=jnp.float32) + bk_ref[0]
    v = jnp.dot(x2, wv_ref[...], preferred_element_type=jnp.float32) + bv_ref[0]
    q_ref[0] = q.astype(jnp.bfloat16)
    k_ref[0] = k.astype(jnp.bfloat16)
    v_ref[0] = v.astype(jnp.bfloat16)


# --------------------------------------------------------------------------
# Main kernel: attention (per query block) + Wo + residual + LN2 + FF + residual.
# --------------------------------------------------------------------------
def _attn_ffn_kernel(x_ref, q_ref, k_ref, v_ref,
                     wo_ref, bo_ref, ln2_g_ref, ln2_b_ref,
                     w1_ref, b1_ref, w2_ref, b2_ref,
                     o_ref, attn_scr, *, heads):
    D = q_ref.shape[2]
    dk = D // heads

    q_blk = q_ref[0]        # (tq, D) bf16, 1/sqrt(dk) already folded in
    k_all = k_ref[0]        # (S, D)  bf16
    v_all = v_ref[0]        # (S, D)  bf16

    # Static head unroll: head h's softmax (VPU/EUP) overlaps head h+1's MXU
    # matmul.  For full MXU fill / lane-dense stores, choose heads so that
    # dk is a multiple of 128 at production sizes.
    for h in range(heads):
        sl = slice(h * dk, (h + 1) * dk)
        s = lax.dot_general(q_blk[:, sl], k_all[:, sl],
                            (((1,), (1,)), ((), ())),
                            preferred_element_type=jnp.float32)     # (tq, S)
        s = s - jnp.max(s, axis=-1, keepdims=True)
        p = jnp.exp(s)
        p = p * pl.reciprocal(jnp.sum(p, axis=-1, keepdims=True), approx=True)
        pv = jnp.dot(p.astype(jnp.bfloat16), v_all[:, sl],
                     preferred_element_type=jnp.float32)            # (tq, dk)
        attn_scr[:, sl] = pv.astype(jnp.bfloat16)

    # Full-width (tq,D)x(D,D) output projection -> full K=D MXU contraction.
    attn = (jnp.dot(attn_scr[...], wo_ref[...],
                    preferred_element_type=jnp.float32) + bo_ref[0])

    # Residual 1 (dropout_1 = identity in eval).
    xr = x_ref[0] + attn

    # norm_2 + feed-forward (dropout inside FF = identity in eval).
    x2b = _layernorm(xr, ln2_g_ref[0], ln2_b_ref[0]).astype(jnp.bfloat16)
    h1 = jnp.dot(x2b, w1_ref[...], preferred_element_type=jnp.float32) + b1_ref[0]
    h1 = jnp.maximum(h1, 0.0).astype(jnp.bfloat16)                   # ReLU
    ff = jnp.dot(h1, w2_ref[...], preferred_element_type=jnp.float32) + b2_ref[0]

    # Residual 2 (dropout_2 = identity in eval).
    o_ref[0] = (xr + ff).astype(o_ref.dtype)


# --------------------------------------------------------------------------
# Wrapper
# --------------------------------------------------------------------------
def _vmem_budget_bytes():
    try:
        cap = int(pltpu.get_tpu_info().vmem_capacity_bytes)
    except Exception:
        cap = 128 * _MiB
    if cap >= 128 * _MiB:                  # v5e / v6e
        return cap, 100 * _MiB
    # v7x (64 MiB/TC): leave headroom for Mosaic internal scratch/semaphores.
    return cap, max(cap - 12 * _MiB, 32 * _MiB)


def _pick_tile(S, tmax):
    for cand in (256, 128, 64, 32, 16, 8):
        if cand <= tmax and S % cand == 0:
            return cand
    return S


def encoder_layer(x, pos, params, *, heads):
    B, S, D = x.shape
    assert D % heads == 0
    if pos is None:
        pos = jnp.zeros_like(x)

    (ln1_g, ln1_b, wq, bq, wk, bk, wv, bv, wo, bo,
     ln2_g, ln2_b, w1, b1, w2, b2) = params

    vmem_cap, vmem_limit = _vmem_budget_bytes()
    # 256-row blocks maximize MXU M-fill on v6e/v7x; cap at 128 on 64-MiB parts.
    tq = _pick_tile(S, 128 if vmem_cap <= 64 * _MiB else 256)
    ts = tq
    n_q, n_s = S // tq, S // ts

    dk = D // heads
    scale = 1.0 / math.sqrt(dk)
    bf = lambda w: w.astype(jnp.bfloat16)   # MXU weight operands in bf16

    # ---- prologue: LN1(x+pos) -> Q (scaled), K, V in bf16 ------------------
    prologue = pl.pallas_call(
        functools.partial(_ln1_qkv_kernel, scale=scale),
        out_shape=(jax.ShapeDtypeStruct((B, S, D), jnp.bfloat16),) * 3,
        grid_spec=pltpu.PrefetchScalarGridSpec(
            num_scalar_prefetch=0,
            grid=(B, n_s),
            in_specs=[
                _seq_spec(ts, D),                            # x
                _seq_spec(ts, D),                            # pos
                _const_spec((1, D)), _const_spec((1, D)),    # ln1 gamma/beta
                _const_spec((D, D)), _const_spec((1, D)),    # wq, bq
                _const_spec((D, D)), _const_spec((1, D)),    # wk, bk
                _const_spec((D, D)), _const_spec((1, D)),    # wv, bv
            ],
            out_specs=[_seq_spec(ts, D)] * 3,
        ),
        compiler_params=pltpu.CompilerParams(
            dimension_semantics=("parallel", "parallel"),
            vmem_limit_bytes=vmem_limit,
        ),
        cost_estimate=pl.CostEstimate(
            flops=int(6 * B * S * D * D),
            transcendentals=int(B * S),
            bytes_accessed=int(2 * B * S * D * 4 + 3 * D * D * 2
                               + 3 * B * S * D * 2),
        ),
    )
    q, k, v = prologue(x, pos, ln1_g, ln1_b, bf(wq), bq, bf(wk), bk, bf(wv), bv)

    # ---- main: attention + FF, both grid axes parallel ----------------------
    main = pl.pallas_call(
        functools.partial(_attn_ffn_kernel, heads=heads),
        out_shape=jax.ShapeDtypeStruct((B, S, D), x.dtype),
        grid_spec=pltpu.PrefetchScalarGridSpec(
            num_scalar_prefetch=0,
            grid=(B, n_q),
            in_specs=[
                _seq_spec(tq, D),                                  # x (residual slice)
                _seq_spec(tq, D),                                  # q (bf16, scaled)
                pl.BlockSpec((1, S, D), lambda b, i: (b, 0, 0)),   # k (full sequence)
                pl.BlockSpec((1, S, D), lambda b, i: (b, 0, 0)),   # v (full sequence)
                _const_spec((D, D)), _const_spec((1, D)),          # wo, bo
                _const_spec((1, D)), _const_spec((1, D)),          # ln2 gamma/beta
                _const_spec((D, 2 * D)), _const_spec((1, 2 * D)),  # ff linear_1
                _const_spec((2 * D, D)), _const_spec((1, D)),      # ff linear_2
            ],
            out_specs=_seq_spec(tq, D),
            scratch_shapes=[
                pltpu.VMEM((tq, D), jnp.bfloat16),   # per-block head outputs
            ],
        ),
        compiler_params=pltpu.CompilerParams(
            dimension_semantics=("parallel", "parallel"),
            vmem_limit_bytes=vmem_limit,
        ),
        cost_estimate=pl.CostEstimate(
            flops=int(B * (4 * S * S * D + 10 * S * D * D)),
            transcendentals=int(B * heads * S * S),
            bytes_accessed=int(2 * B * S * D * 4 + B * S * D * 2
                               + 2 * B * n_q * S * D * 2 + 5 * D * D * 2),
        ),
    )
    return main(x, q, k, v, bf(wo), bo, ln2_g, ln2_b, bf(w1), b1, bf(w2), b2)


# --------------------------------------------------------------------------
# Parameters & pure-JAX reference
# --------------------------------------------------------------------------
def make_params(key, d_model):
    """Deterministic init. Linear weights are stored as [in, out], f32."""
    D = d_model
    ks = jax.random.split(key, 10)

    def lin(k, fan_in, fan_out):
        bound = 1.0 / math.sqrt(fan_in)
        kw, kb = jax.random.split(k)
        w = jax.random.uniform(kw, (fan_in, fan_out), jnp.float32, -bound, bound)
        b = jax.random.uniform(kb, (1, fan_out), jnp.float32, -bound, bound)
        return w, b

    ln1_g = jnp.ones((1, D), jnp.float32)
    ln1_b = jnp.zeros((1, D), jnp.float32)
    ln2_g = jnp.ones((1, D), jnp.float32)
    ln2_b = jnp.zeros((1, D), jnp.float32)

    wq, bq = lin(ks[0], D, D)
    wk, bk = lin(ks[1], D, D)
    wv, bv = lin(ks[2], D, D)
    wo, bo = lin(ks[3], D, D)
    w1, b1 = lin(ks[4], D, 2 * D)
    w2, b2 = lin(ks[5], 2 * D, D)

    return (ln1_g, ln1_b, wq, bq, wk, bk, wv, bv, wo, bo,
            ln2_g, ln2_b, w1, b1, w2, b2)


def encoder_layer_ref(x, pos, params, *, heads):
    """Pure-JAX f32 reference for validation."""
    (ln1_g, ln1_b, wq, bq, wk, bk, wv, bv, wo, bo,
     ln2_g, ln2_b, w1, b1, w2, b2) = params
    B, S, D = x.shape
    dk = D // heads

    def ln(h, g, b):
        mu = jnp.mean(h, -1, keepdims=True)
        var = jnp.mean((h - mu) ** 2, -1, keepdims=True)
        return (h - mu) / jnp.sqrt(var + EPS) * g + b

    x2 = ln(x + pos, ln1_g[0], ln1_b[0])
    q = (x2 @ wq + bq[0]).reshape(B, S, heads, dk).transpose(0, 2, 1, 3)
    k = (x2 @ wk + bk[0]).reshape(B, S, heads, dk).transpose(0, 2, 1, 3)
    v = (x2 @ wv + bv[0]).reshape(B, S, heads, dk).transpose(0, 2, 1, 3)
    s = jnp.einsum("bhqd,bhkd->bhqk", q, k) / math.sqrt(dk)
    p = jax.nn.softmax(s, axis=-1)
    o = jnp.einsum("bhqk,bhkd->bhqd", p, v).transpose(0, 2, 1, 3).reshape(B, S, D)
    attn = o @ wo + bo[0]
    x = x + attn
    x2 = ln(x, ln2_g[0], ln2_b[0])
    ff = jnp.maximum(x2 @ w1 + b1[0], 0.0) @ w2 + b2[0]
    return x + ff


if __name__ == "__main__":
    B, S, D, H = 2, 8, 32, 4
    key = jax.random.PRNGKey(0)
    kx, kp, kw = jax.random.split(key, 3)
    x = jax.random.normal(kx, (B, S, D), jnp.float32)
    pos = jax.random.normal(kp, (B, S, D), jnp.float32)
    params = make_params(kw, D)

    out = encoder_layer(x, pos, params, heads=H)
    out = jax.block_until_ready(out)

    ref = encoder_layer_ref(x, pos, params, heads=H)
    assert out.shape == (B, S, D)
    # bf16 matmul operands + approx reciprocal -> relaxed tolerance vs f32 ref.
    err = jnp.max(jnp.abs(out - ref))
    assert jnp.allclose(out, ref, atol=5e-2, rtol=5e-2), f"max err {err}"
    print("KERNEL_OK")
</pallas_src>

<mosaic_0001>
module attributes {stable_mosaic.version = 11 : i64} {
  func.func @_ln1_qkv_kernel(%arg0: i32, %arg1: i32, %arg2: memref<1x8x32xf32, #tpu.memory_space<vmem>>, %arg3: memref<1x8x32xf32, #tpu.memory_space<vmem>>, %arg4: memref<1x32xf32, #tpu.memory_space<vmem>>, %arg5: memref<1x32xf32, #tpu.memory_space<vmem>>, %arg6: memref<32x32xbf16, #tpu.memory_space<vmem>>, %arg7: memref<1x32xf32, #tpu.memory_space<vmem>>, %arg8: memref<32x32xbf16, #tpu.memory_space<vmem>>, %arg9: memref<1x32xf32, #tpu.memory_space<vmem>>, %arg10: memref<32x32xbf16, #tpu.memory_space<vmem>>, %arg11: memref<1x32xf32, #tpu.memory_space<vmem>>, %arg12: memref<1x8x32xbf16, #tpu.memory_space<vmem>>, %arg13: memref<1x8x32xbf16, #tpu.memory_space<vmem>>, %arg14: memref<1x8x32xbf16, #tpu.memory_space<vmem>>) attributes {dimension_semantics = [#tpu.dimension_semantics<parallel>, #tpu.dimension_semantics<parallel>], iteration_bounds = array<i64: 2, 1>, scalar_prefetch = 0 : i64, scratch_operands = 0 : i64, tpu.core_type = #tpu.core_type<tc>, window_params = [{transform_indices = @transform_0, window_bounds = array<i64: 1, 8, 32>}, {transform_indices = @transform_1, window_bounds = array<i64: 1, 8, 32>}, {pipeline_mode = #tpu.pipeline_mode<synchronous>, transform_indices = @transform_2, window_bounds = array<i64: 1, 32>}, {pipeline_mode = #tpu.pipeline_mode<synchronous>, transform_indices = @transform_3, window_bounds = array<i64: 1, 32>}, {pipeline_mode = #tpu.pipeline_mode<synchronous>, transform_indices = @transform_4, window_bounds = array<i64: 32, 32>}, {pipeline_mode = #tpu.pipeline_mode<synchronous>, transform_indices = @transform_5, window_bounds = array<i64: 1, 32>}, {pipeline_mode = #tpu.pipeline_mode<synchronous>, transform_indices = @transform_6, window_bounds = array<i64: 32, 32>}, {pipeline_mode = #tpu.pipeline_mode<synchronous>, transform_indices = @transform_7, window_bounds = array<i64: 1, 32>}, {pipeline_mode = #tpu.pipeline_mode<synchronous>, transform_indices = @transform_8, window_bounds = array<i64: 32, 32>}, {pipeline_mode = #tpu.pipeline_mode<synchronous>, transform_indices = @transform_9, window_bounds = array<i64: 1, 32>}, {transform_indices = @transform_10, window_bounds = array<i64: 1, 8, 32>}, {transform_indices = @transform_11, window_bounds = array<i64: 1, 8, 32>}, {transform_indices = @transform_12, window_bounds = array<i64: 1, 8, 32>}]} {
    %c0 = arith.constant 0 : index
    %c0_0 = arith.constant 0 : index
    %c0_1 = arith.constant 0 : index
    %0 = vector.load %arg2[%c0, %c0_0, %c0_1] : memref<1x8x32xf32, #tpu.memory_space<vmem>>, vector<1x8x32xf32>
    %1 = vector.shape_cast %0 : vector<1x8x32xf32> to vector<8x32xf32>
    %c0_2 = arith.constant 0 : index
    %c0_3 = arith.constant 0 : index
    %c0_4 = arith.constant 0 : index
    %2 = vector.load %arg3[%c0_2, %c0_3, %c0_4] : memref<1x8x32xf32, #tpu.memory_space<vmem>>, vector<1x8x32xf32>
    %3 = vector.shape_cast %2 : vector<1x8x32xf32> to vector<8x32xf32>
    %4 = arith.addf %1, %3 : vector<8x32xf32>
    %c0_5 = arith.constant 0 : index
    %c0_6 = arith.constant 0 : index
    %5 = vector.load %arg4[%c0_5, %c0_6] : memref<1x32xf32, #tpu.memory_space<vmem>>, vector<1x32xf32>
    %6 = vector.shape_cast %5 : vector<1x32xf32> to vector<32xf32>
    %c0_7 = arith.constant 0 : index
    %c0_8 = arith.constant 0 : index
    %7 = vector.load %arg5[%c0_7, %c0_8] : memref<1x32xf32, #tpu.memory_space<vmem>>, vector<1x32xf32>
    %8 = vector.shape_cast %7 : vector<1x32xf32> to vector<32xf32>
    %cst = arith.constant dense<0.000000e+00> : vector<8xf32>
    %9 = vector.multi_reduction <add>, %4, %cst [1] : vector<8x32xf32> to vector<8xf32>
    %10 = vector.shape_cast %9 : vector<8xf32> to vector<8x1xf32>
    %cst_9 = arith.constant 3.200000e+01 : f32
    %11 = vector.broadcast %cst_9 : f32 to vector<8x1xf32>
    %12 = arith.divf %10, %11 : vector<8x1xf32>
    %13 = vector.broadcast %12 : vector<8x1xf32> to vector<8x32xf32>
    %14 = arith.subf %4, %13 : vector<8x32xf32>
    %15 = arith.mulf %14, %14 : vector<8x32xf32>
    %cst_10 = arith.constant dense<0.000000e+00> : vector<8xf32>
    %16 = vector.multi_reduction <add>, %15, %cst_10 [1] : vector<8x32xf32> to vector<8xf32>
    %17 = vector.shape_cast %16 : vector<8xf32> to vector<8x1xf32>
    %cst_11 = arith.constant 3.200000e+01 : f32
    %18 = vector.broadcast %cst_11 : f32 to vector<8x1xf32>
    %19 = arith.divf %17, %18 : vector<8x1xf32>
    %20 = vector.broadcast %12 : vector<8x1xf32> to vector<8x32xf32>
    %21 = arith.subf %4, %20 : vector<8x32xf32>
    %cst_12 = arith.constant 9.99999974E-6 : f32
    %22 = vector.broadcast %cst_12 : f32 to vector<8x1xf32>
    %23 = arith.addf %19, %22 : vector<8x1xf32>
    %24 = math.rsqrt %23 : vector<8x1xf32>
    %25 = vector.broadcast %24 : vector<8x1xf32> to vector<8x32xf32>
    %26 = arith.mulf %21, %25 : vector<8x32xf32>
    %27 = vector.shape_cast %6 : vector<32xf32> to vector<1x32xf32>
    %28 = vector.broadcast %27 : vector<1x32xf32> to vector<8x32xf32>
    %29 = arith.mulf %26, %28 : vector<8x32xf32>
    %30 = vector.shape_cast %8 : vector<32xf32> to vector<1x32xf32>
    %31 = vector.broadcast %30 : vector<1x32xf32> to vector<8x32xf32>
    %32 = arith.addf %29, %31 : vector<8x32xf32>
    %33 = arith.truncf %32 : vector<8x32xf32> to vector<8x32xbf16>
    %c0_13 = arith.constant 0 : index
    %c0_14 = arith.constant 0 : index
    %34 = vector.load %arg6[%c0_13, %c0_14] : memref<32x32xbf16, #tpu.memory_space<vmem>>, vector<32x32xbf16>
    %cst_15 = arith.constant dense<0.000000e+00> : vector<8x32xf32>
    %35 = tpu.matmul %33, %34, %cst_15 {dimension_numbers = #tpu.dot_dimension_numbers<[1], [0], [0], [1], [0, 0, 1, 1], [], []>} : vector<8x32xbf16>, vector<32x32xbf16>, vector<8x32xf32> -> vector<8x32xf32>
    %c0_16 = arith.constant 0 : index
    %c0_17 = arith.constant 0 : index
    %36 = vector.load %arg7[%c0_16, %c0_17] : memref<1x32xf32, #tpu.memory_space<vmem>>, vector<1x32xf32>
    %37 = vector.shape_cast %36 : vector<1x32xf32> to vector<32xf32>
    %38 = vector.shape_cast %37 : vector<32xf32> to vector<1x32xf32>
    %39 = vector.broadcast %38 : vector<1x32xf32> to vector<8x32xf32>
    %40 = arith.addf %35, %39 : vector<8x32xf32>
    %cst_18 = arith.constant 0.353553385 : f32
    %41 = vector.broadcast %cst_18 : f32 to vector<8x32xf32>
    %42 = arith.mulf %40, %41 : vector<8x32xf32>
    %c0_19 = arith.constant 0 : index
    %c0_20 = arith.constant 0 : index
    %43 = vector.load %arg8[%c0_19, %c0_20] : memref<32x32xbf16, #tpu.memory_space<vmem>>, vector<32x32xbf16>
    %cst_21 = arith.constant dense<0.000000e+00> : vector<8x32xf32>
    %44 = tpu.matmul %33, %43, %cst_21 {dimension_numbers = #tpu.dot_dimension_numbers<[1], [0], [0], [1], [0, 0, 1, 1], [], []>} : vector<8x32xbf16>, vector<32x32xbf16>, vector<8x32xf32> -> vector<8x32xf32>
    %c0_22 = arith.constant 0 : index
    %c0_23 = arith.constant 0 : index
    %45 = vector.load %arg9[%c0_22, %c0_23] : memref<1x32xf32, #tpu.memory_space<vmem>>, vector<1x32xf32>
    %46 = vector.shape_cast %45 : vector<1x32xf32> to vector<32xf32>
    %47 = vector.shape_cast %46 : vector<32xf32> to vector<1x32xf32>
    %48 = vector.broadcast %47 : vector<1x32xf32> to vector<8x32xf32>
    %49 = arith.addf %44, %48 : vector<8x32xf32>
    %c0_24 = arith.constant 0 : index
    %c0_25 = arith.constant 0 : index
    %50 = vector.load %arg10[%c0_24, %c0_25] : memref<32x32xbf16, #tpu.memory_space<vmem>>, vector<32x32xbf16>
    %cst_26 = arith.constant dense<0.000000e+00> : vector<8x32xf32>
    %51 = tpu.matmul %33, %50, %cst_26 {dimension_numbers = #tpu.dot_dimension_numbers<[1], [0], [0], [1], [0, 0, 1, 1], [], []>} : vector<8x32xbf16>, vector<32x32xbf16>, vector<8x32xf32> -> vector<8x32xf32>
    %c0_27 = arith.constant 0 : index
    %c0_28 = arith.constant 0 : index
    %52 = vector.load %arg11[%c0_27, %c0_28] : memref<1x32xf32, #tpu.memory_space<vmem>>, vector<1x32xf32>
    %53 = vector.shape_cast %52 : vector<1x32xf32> to vector<32xf32>
    %54 = vector.shape_cast %53 : vector<32xf32> to vector<1x32xf32>
    %55 = vector.broadcast %54 : vector<1x32xf32> to vector<8x32xf32>
    %56 = arith.addf %51, %55 : vector<8x32xf32>
    %57 = arith.truncf %42 : vector<8x32xf32> to vector<8x32xbf16>
    %c0_29 = arith.constant 0 : index
    %c0_30 = arith.constant 0 : index
    %c0_31 = arith.constant 0 : index
    %58 = vector.load %arg12[%c0_29, %c0_30, %c0_31] : memref<1x8x32xbf16, #tpu.memory_space<vmem>>, vector<1x8x32xbf16>
    %59 = vector.shape_cast %58 : vector<1x8x32xbf16> to vector<8x32xbf16>
    %60 = vector.shape_cast %57 : vector<8x32xbf16> to vector<1x8x32xbf16>
    tpu.vector_store %arg12[%c0_29, %c0_30, %c0_31], %60 {strides = array<i32>} : memref<1x8x32xbf16, #tpu.memory_space<vmem>>, vector<1x8x32xbf16>,
    %61 = arith.truncf %49 : vector<8x32xf32> to vector<8x32xbf16>
    %c0_32 = arith.constant 0 : index
    %c0_33 = arith.constant 0 : index
    %c0_34 = arith.constant 0 : index
    %62 = vector.load %arg13[%c0_32, %c0_33, %c0_34] : memref<1x8x32xbf16, #tpu.memory_space<vmem>>, vector<1x8x32xbf16>
    %63 = vector.shape_cast %62 : vector<1x8x32xbf16> to vector<8x32xbf16>
    %64 = vector.shape_cast %61 : vector<8x32xbf16> to vector<1x8x32xbf16>
    tpu.vector_store %arg13[%c0_32, %c0_33, %c0_34], %64 {strides = array<i32>} : memref<1x8x32xbf16, #tpu.memory_space<vmem>>, vector<1x8x32xbf16>,
    %65 = arith.truncf %56 : vector<8x32xf32> to vector<8x32xbf16>
    %c0_35 = arith.constant 0 : index
    %c0_36 = arith.constant 0 : index
    %c0_37 = arith.constant 0 : index
    %66 = vector.load %arg14[%c0_35, %c0_36, %c0_37] : memref<1x8x32xbf16, #tpu.memory_space<vmem>>, vector<1x8x32xbf16>
    %67 = vector.shape_cast %66 : vector<1x8x32xbf16> to vector<8x32xbf16>
    %68 = vector.shape_cast %65 : vector<8x32xbf16> to vector<1x8x32xbf16>
    tpu.vector_store %arg14[%c0_35, %c0_36, %c0_37], %68 {strides = array<i32>} : memref<1x8x32xbf16, #tpu.memory_space<vmem>>, vector<1x8x32xbf16>,
    return
  }
  func.func @transform_0(%arg0: i32, %arg1: i32) -> (i32, i32, i32) {
    %c0_i32 = arith.constant 0 : i32
    %c0_i32_0 = arith.constant 0 : i32
    return %arg0, %arg1, %c0_i32 : i32, i32, i32
  }
  func.func @transform_1(%arg0: i32, %arg1: i32) -> (i32, i32, i32) {
    %c0_i32 = arith.constant 0 : i32
    %c0_i32_0 = arith.constant 0 : i32
    return %arg0, %arg1, %c0_i32 : i32, i32, i32
  }
  func.func @transform_2(%arg0: i32, %arg1: i32) -> (i32, i32) {
    %c0_i32 = arith.constant 0 : i32
    %c0_i32_0 = arith.constant 0 : i32
    %c0_i32_1 = arith.constant 0 : i32
    return %c0_i32, %c0_i32_0 : i32, i32
  }
  func.func @transform_3(%arg0: i32, %arg1: i32) -> (i32, i32) {
    %c0_i32 = arith.constant 0 : i32
    %c0_i32_0 = arith.constant 0 : i32
    %c0_i32_1 = arith.constant 0 : i32
    return %c0_i32, %c0_i32_0 : i32, i32
  }
  func.func @transform_4(%arg0: i32, %arg1: i32) -> (i32, i32) {
    %c0_i32 = arith.constant 0 : i32
    %c0_i32_0 = arith.constant 0 : i32
    %c0_i32_1 = arith.constant 0 : i32
    return %c0_i32, %c0_i32_0 : i32, i32
  }
  func.func @transform_5(%arg0: i32, %arg1: i32) -> (i32, i32) {
    %c0_i32 = arith.constant 0 : i32
    %c0_i32_0 = arith.constant 0 : i32
    %c0_i32_1 = arith.constant 0 : i32
    return %c0_i32, %c0_i32_0 : i32, i32
  }
  func.func @transform_6(%arg0: i32, %arg1: i32) -> (i32, i32) {
    %c0_i32 = arith.constant 0 : i32
    %c0_i32_0 = arith.constant 0 : i32
    %c0_i32_1 = arith.constant 0 : i32
    return %c0_i32, %c0_i32_0 : i32, i32
  }
  func.func @transform_7(%arg0: i32, %arg1: i32) -> (i32, i32) {
    %c0_i32 = arith.constant 0 : i32
    %c0_i32_0 = arith.constant 0 : i32
    %c0_i32_1 = arith.constant 0 : i32
    return %c0_i32, %c0_i32_0 : i32, i32
  }
  func.func @transform_8(%arg0: i32, %arg1: i32) -> (i32, i32) {
    %c0_i32 = arith.constant 0 : i32
    %c0_i32_0 = arith.constant 0 : i32
    %c0_i32_1 = arith.constant 0 : i32
    return %c0_i32, %c0_i32_0 : i32, i32
  }
  func.func @transform_9(%arg0: i32, %arg1: i32) -> (i32, i32) {
    %c0_i32 = arith.constant 0 : i32
    %c0_i32_0 = arith.constant 0 : i32
    %c0_i32_1 = arith.constant 0 : i32
    return %c0_i32, %c0_i32_0 : i32, i32
  }
  func.func @transform_10(%arg0: i32, %arg1: i32) -> (i32, i32, i32) {
    %c0_i32 = arith.constant 0 : i32
    %c0_i32_0 = arith.constant 0 : i32
    return %arg0, %arg1, %c0_i32 : i32, i32, i32
  }
  func.func @transform_11(%arg0: i32, %arg1: i32) -> (i32, i32, i32) {
    %c0_i32 = arith.constant 0 : i32
    %c0_i32_0 = arith.constant 0 : i32
    return %arg0, %arg1, %c0_i32 : i32, i32, i32
  }
  func.func @transform_12(%arg0: i32, %arg1: i32) -> (i32, i32, i32) {
    %c0_i32 = arith.constant 0 : i32
    %c0_i32_0 = arith.constant 0 : i32
    return %arg0, %arg1, %c0_i32 : i32, i32, i32
  }
}

</mosaic_0001>

<llo_original>
// kernel: tpu_custom_call.1
$region0: #{tpu_custom_call.1}
  #allocation0 [shape = 'u32[]', space=smem, size = 0x4, offset = 0x4, fixed_abs, tag = 'smem constant byte address 0x4 - core index']
  #allocation1 [shape = 'u32[144,128]{1,0:T(1,128)}', space=vmem, size = 0x12000, scoped, tag = 'internal scratch']
  %s0 = inlined_call_operand.hbm [shape: f32[2,8,32], index: 0, kind: input, shape index: {}]
  %s1 = inlined_call_operand.hbm [shape: f32[2,8,32], index: 1, kind: input, shape index: {}]
  %s2 = inlined_call_operand.vmem [shape: f32[1,32], index: 2, kind: input, shape index: {}]
  %s3 = inlined_call_operand.vmem [shape: f32[1,32], index: 3, kind: input, shape index: {}]
  %s4 = inlined_call_operand.hbm [shape: bf16[32,32], index: 4, kind: input, shape index: {}]
  %s5 = inlined_call_operand.vmem [shape: f32[1,32], index: 5, kind: input, shape index: {}]
  %s6 = inlined_call_operand.hbm [shape: bf16[32,32], index: 6, kind: input, shape index: {}]
  %s7 = inlined_call_operand.vmem [shape: f32[1,32], index: 7, kind: input, shape index: {}]
  %s8 = inlined_call_operand.hbm [shape: bf16[32,32], index: 8, kind: input, shape index: {}]
  %s9 = inlined_call_operand.vmem [shape: f32[1,32], index: 9, kind: input, shape index: {}]
  %s10 = inlined_call_operand.hbm [shape: bf16[2,8,32], index: 10, kind: output, shape index: {0}]
  %s11 = inlined_call_operand.hbm [shape: bf16[2,8,32], index: 11, kind: output, shape index: {1}]
  %s12 = inlined_call_operand.hbm [shape: bf16[2,8,32], index: 12, kind: output, shape index: {2}]
  %13 = xla_tuple %s10, %s11, %s12
  %s14 = sld [smem:[#allocation0]]
  $region109: #{tpu_custom_call.1} parent=0
    _
  %s16 = ssub.s32 1, %s14
  %s17 = scalar_select 0, %s16, %s14
  $region1: #{tpu_custom_call.1} parent=0
    #allocation2 [shape = 'u8[8192]{0}', space=vmem, size = 0x2000, scoped, tag = 'input window, operand 0']
    #allocation3 [shape = 's32[2]{0}', space=sflag, size = 0x8, scoped, tag = 'scoped memory for tpu_custom_call.1']
    #allocation4 [shape = 's32[2]{0}', space=sflag, size = 0x8, scoped, tag = 'scoped memory for tpu_custom_call.1']
    #allocation5 [shape = 'u8[8192]{0}', space=vmem, size = 0x2000, scoped, tag = 'input window, operand 1']
    #allocation6 [shape = 's32[2]{0}', space=sflag, size = 0x8, scoped, tag = 'scoped memory for tpu_custom_call.1']
    #allocation7 [shape = 'u8[8192]{0}', space=vmem, size = 0x2000, scoped, tag = 'input window, operand 4, single buffered']
    #allocation8 [shape = 'u8[8192]{0}', space=vmem, size = 0x2000, scoped, tag = 'input window, operand 6, single buffered']
    #allocation9 [shape = 's32[1]{0}', space=sflag, size = 0x4, scoped, tag = 'scoped memory for tpu_custom_call.1']
    #allocation10 [shape = 'u8[8192]{0}', space=vmem, size = 0x2000, scoped, tag = 'input window, operand 8, single buffered']
    #allocation11 [shape = 'u8[4096]{0}', space=vmem, size = 0x1000, scoped, tag = 'output window, operand 0']
    #allocation12 [shape = 'u8[4096]{0}', space=vmem, size = 0x1000, scoped, tag = 'output window, operand 1']
    #allocation13 [shape = 's32[2]{0}', space=sflag, size = 0x8, scoped, tag = 'scoped memory for tpu_custom_call.1']
    #allocation14 [shape = 'u8[4096]{0}', space=vmem, size = 0x1000, scoped, tag = 'output window, operand 2']
    %18 = vsyncpa [#allocation3], 0
    %s19 = scalar_lea.sflag [#allocation3], 1
    %20 = vsyncpa %s19, 0
    %21 = vsyncpa [#allocation6], 0
    %s22 = scalar_lea.sflag [#allocation6], 1
    %23 = vsyncpa %s22, 0
    %24 = vsyncpa [#allocation9], 0
    %25 = vsyncpa [#allocation4], 0
    %s26 = scalar_lea.sflag [#allocation4], 1
    %27 = vsyncpa %s26, 0
    %28 = vsyncpa [#allocation13], 0
    %s29 = scalar_lea.sflag [#allocation13], 1
    %30 = vsyncpa %s29, 0
    loop: start=0, step=1, limit=4
    $region2: #{tpu_custom_call.1} parent=1 // loop_pre_header
      _
    $region3: #{tpu_custom_call.1} parent=1 // loop_header
      %s32 = sphi 0, %s36
      %p33 = scmp.ge.s32.totalorder %s32, 4
      %s39 = sphi 0, %s51
      %s40 = sphi 0, %s47
      %s41 = sphi 0, %s39
      %s42 = sphi 0, %s40
      %s43 = sphi 0, %s41
      %s44 = sphi 0, %s42
      %s56 = sphi 0, %s58
      %s59 = sphi 0, %s56
      %s60 = sphi 0, %s59
      %s76 = sphi 0, %s60
      %s84 = sphi 0, %s86
      %s87 = sphi 0, %s84
      %s88 = sphi 0, %s87
      %s104 = sphi 0, %s88
      %s108 = sphi 0, %s108
      %s110 = sphi 0, %s108
      %s111 = sphi 0, %s110
      %s125 = sphi 0, %s111
      %s129 = sphi 0, %s129
      %s131 = sphi 0, %s129
      %s132 = sphi 0, %s131
      %s146 = sphi 0, %s132
      %s150 = sphi 0, %s150
      %s152 = sphi 0, %s150
      %s153 = sphi 0, %s152
      %s167 = sphi 0, %s153
      %s171 = sphi 0, %s171
      %s173 = sphi 0, %s171
      %s174 = sphi 0, %s173
      %s188 = sphi 0, %s174
      %s192 = sphi 0, %s192
      %s194 = sphi 0, %s192
      %s195 = sphi 0, %s194
      %s209 = sphi 0, %s195
      %s213 = sphi 0, %s213
      %s215 = sphi 0, %s213
      %s216 = sphi 0, %s215
      %s230 = sphi 0, %s216
      %s234 = sphi 0, %s234
      %s236 = sphi 0, %s234
      %s237 = sphi 0, %s236
      %s251 = sphi 0, %s237
      %s255 = sphi 0, %s255
      %s257 = sphi 0, %s255
      %s258 = sphi 0, %s257
      %s272 = sphi 0, %s258
      %s280 = sphi 0, %s282
      %s283 = sphi 0, %s280
      %s284 = sphi 0, %s283
      %s300 = sphi 0, %s284
      %s308 = sphi 0, %s310
      %s311 = sphi 0, %s308
      %s312 = sphi 0, %s311
      %s328 = sphi 0, %s312
      %s336 = sphi 0, %s338
      %s339 = sphi 0, %s336
      %s340 = sphi 0, %s339
      %s356 = sphi 0, %s340
    $region4: #{tpu_custom_call.1} parent=1 // loop_header_branch
      %35 = sbr.rel (%p33) target = $region8
    $region5: #{tpu_custom_call.1} parent=1 // loop_body
      %s37 = ssub.s32 %s32, 1
      %s38 = ssub.s32 %s32, 2
      %s45 = sadd.s32 1, %s40
      %p46 = scmp.ge.s32.totalorder %s45, 1
      %s47 = scalar_select %p46, 0, %s45
      %s48 = sadd.s32 1, %s39
      %s49 = scalar_select %p46, %s48, %s39
      %p50 = scmp.ge.s32.totalorder %s49, 2
      %s51 = scalar_select %p50, 0, %s49
      %s52 = ssub.s32 %s39, %s51
      %s53 = ssub.s32 %s40, %s47
      %s54 = sor.u32 %s52, %s53
      %p55 = scmp.eq.s32.totalorder %s54, 0
      %s57 = sadd.s32 %s56, 1
      %s58 = scalar_select %p55, %s56, %s57
      %p61 = pneg %p55
      %p62 = scmp.eq.s32.totalorder %s32, 1
      %p63 = por %p61, %p62
      %p64 = scmp.ne.s32.totalorder %s56, %s59
      %p65 = scmp.eq.s32.totalorder %s32, 0
      %p66 = por %p64, %p65
      %p67 = scmp.ne.s32.totalorder %s56, %s59
      %p68 = scmp.eq.s32.totalorder %s37, 1
      %p69 = por %p67, %p68
      %p70 = scmp.ne.s32.totalorder %s59, %s60
      %p71 = scmp.eq.s32.totalorder %s37, 0
      %p72 = por %p70, %p71
      %p73 = scmp.ne.s32.totalorder %s59, %s60
      %p74 = scmp.eq.s32.totalorder %s38, 1
      %p75 = por %p73, %p74
      %p77 = scmp.ne.s32.totalorder %s60, %s76
      %p78 = scmp.eq.s32.totalorder %s38, 0
      %p79 = por %p77, %p78
      %s80 = ssub.s32 %s39, %s51
      %s81 = ssub.s32 %s40, %s47
      %s82 = sor.u32 %s80, %s81
      %p83 = scmp.eq.s32.totalorder %s82, 0
      %s85 = sadd.s32 %s84, 1
      %s86 = scalar_select %p83, %s84, %s85
      %p89 = pneg %p83
      %p90 = scmp.eq.s32.totalorder %s32, 1
      %p91 = por %p89, %p90
      %p92 = scmp.ne.s32.totalorder %s84, %s87
      %p93 = scmp.eq.s32.totalorder %s32, 0
      %p94 = por %p92, %p93
      %p95 = scmp.ne.s32.totalorder %s84, %s87
      %p96 = scmp.eq.s32.totalorder %s37, 1
      %p97 = por %p95, %p96
      %p98 = scmp.ne.s32.totalorder %s87, %s88
      %p99 = scmp.eq.s32.totalorder %s37, 0
      %p100 = por %p98, %p99
      %p101 = scmp.ne.s32.totalorder %s87, %s88
      %p102 = scmp.eq.s32.totalorder %s38, 1
      %p103 = por %p101, %p102
      %p105 = scmp.ne.s32.totalorder %s88, %s104
      %p106 = scmp.eq.s32.totalorder %s38, 0
      %p107 = por %p105, %p106
      %s109 = sadd.s32 %s108, 1
      %p112 = scmp.eq.s32.totalorder %s32, 1
      %p113 = scmp.ne.s32.totalorder %s108, %s110
      %p114 = scmp.eq.s32.totalorder %s32, 0
      %p115 = por %p113, %p114
      %p116 = scmp.ne.s32.totalorder %s108, %s110
      %p117 = scmp.eq.s32.totalorder %s37, 1
      %p118 = por %p116, %p117
      %p119 = scmp.ne.s32.totalorder %s110, %s111
      %p120 = scmp.eq.s32.totalorder %s37, 0
      %p121 = por %p119, %p120
      %p122 = scmp.ne.s32.totalorder %s110, %s111
      %p123 = scmp.eq.s32.totalorder %s38, 1
      %p124 = por %p122, %p123
      %p126 = scmp.ne.s32.totalorder %s111, %s125
      %p127 = scmp.eq.s32.totalorder %s38, 0
      %p128 = por %p126, %p127
      %s130 = sadd.s32 %s129, 1
      %p133 = scmp.eq.s32.totalorder %s32, 1
      %p134 = scmp.ne.s32.totalorder %s129, %s131
      %p135 = scmp.eq.s32.totalorder %s32, 0
      %p136 = por %p134, %p135
      %p137 = scmp.ne.s32.totalorder %s129, %s131
      %p138 = scmp.eq.s32.totalorder %s37, 1
      %p139 = por %p137, %p138
      %p140 = scmp.ne.s32.totalorder %s131, %s132
      %p141 = scmp.eq.s32.totalorder %s37, 0
      %p142 = por %p140, %p141
      %p143 = scmp.ne.s32.totalorder %s131, %s132
      %p144 = scmp.eq.s32.totalorder %s38, 1
      %p145 = por %p143, %p144
      %p147 = scmp.ne.s32.totalorder %s132, %s146
      %p148 = scmp.eq.s32.totalorder %s38, 0
      %p149 = por %p147, %p148
      %s151 = sadd.s32 %s150, 1
      %p154 = scmp.eq.s32.totalorder %s32, 1
      %p155 = scmp.ne.s32.totalorder %s150, %s152
      %p156 = scmp.eq.s32.totalorder %s32, 0
      %p157 = por %p155, %p156
      %p158 = scmp.ne.s32.totalorder %s150, %s152
      %p159 = scmp.eq.s32.totalorder %s37, 1
      %p160 = por %p158, %p159
      %p161 = scmp.ne.s32.totalorder %s152, %s153
      %p162 = scmp.eq.s32.totalorder %s37, 0
      %p163 = por %p161, %p162
      %p164 = scmp.ne.s32.totalorder %s152, %s153
      %p165 = scmp.eq.s32.totalorder %s38, 1
      %p166 = por %p164, %p165
      %p168 = scmp.ne.s32.totalorder %s153, %s167
      %p169 = scmp.eq.s32.totalorder %s38, 0
      %p170 = por %p168, %p169
      %s172 = sadd.s32 %s171, 1
      %p175 = scmp.eq.s32.totalorder %s32, 1
      %p176 = scmp.ne.s32.totalorder %s171, %s173
      %p177 = scmp.eq.s32.totalorder %s32, 0
      %p178 = por %p176, %p177
      %p179 = scmp.ne.s32.totalorder %s171, %s173
      %p180 = scmp.eq.s32.totalorder %s37, 1
      %p181 = por %p179, %p180
      %p182 = scmp.ne.s32.totalorder %s173, %s174
      %p183 = scmp.eq.s32.totalorder %s37, 0
      %p184 = por %p182, %p183
      %p185 = scmp.ne.s32.totalorder %s173, %s174
      %p186 = scmp.eq.s32.totalorder %s38, 1
      %p187 = por %p185, %p186
      %p189 = scmp.ne.s32.totalorder %s174, %s188
      %p190 = scmp.eq.s32.totalorder %s38, 0
      %p191 = por %p189, %p190
      %s193 = sadd.s32 %s192, 1
      %p196 = scmp.eq.s32.totalorder %s32, 1
      %p197 = scmp.ne.s32.totalorder %s192, %s194
      %p198 = scmp.eq.s32.totalorder %s32, 0
      %p199 = por %p197, %p198
      %p200 = scmp.ne.s32.totalorder %s192, %s194
      %p201 = scmp.eq.s32.totalorder %s37, 1
      %p202 = por %p200, %p201
      %p203 = scmp.ne.s32.totalorder %s194, %s195
      %p204 = scmp.eq.s32.totalorder %s37, 0
      %p205 = por %p203, %p204
      %p206 = scmp.ne.s32.totalorder %s194, %s195
      %p207 = scmp.eq.s32.totalorder %s38, 1
      %p208 = por %p206, %p207
      %p210 = scmp.ne.s32.totalorder %s195, %s209
      %p211 = scmp.eq.s32.totalorder %s38, 0
      %p212 = por %p210, %p211
      %s214 = sadd.s32 %s213, 1
      %p217 = scmp.eq.s32.totalorder %s32, 1
      %p218 = scmp.ne.s32.totalorder %s213, %s215
      %p219 = scmp.eq.s32.totalorder %s32, 0
      %p220 = por %p218, %p219
      %p221 = scmp.ne.s32.totalorder %s213, %s215
      %p222 = scmp.eq.s32.totalorder %s37, 1
      %p223 = por %p221, %p222
      %p224 = scmp.ne.s32.totalorder %s215, %s216
      %p225 = scmp.eq.s32.totalorder %s37, 0
      %p226 = por %p224, %p225
      %p227 = scmp.ne.s32.totalorder %s215, %s216
      %p228 = scmp.eq.s32.totalorder %s38, 1
      %p229 = por %p227, %p228
      %p231 = scmp.ne.s32.totalorder %s216, %s230
      %p232 = scmp.eq.s32.totalorder %s38, 0
      %p233 = por %p231, %p232
      %s235 = sadd.s32 %s234, 1
      %p238 = scmp.eq.s32.totalorder %s32, 1
      %p239 = scmp.ne.s32.totalorder %s234, %s236
      %p240 = scmp.eq.s32.totalorder %s32, 0
      %p241 = por %p239, %p240
      %p242 = scmp.ne.s32.totalorder %s234, %s236
      %p243 = scmp.eq.s32.totalorder %s37, 1
      %p244 = por %p242, %p243
      %p245 = scmp.ne.s32.totalorder %s236, %s237
      %p246 = scmp.eq.s32.totalorder %s37, 0
      %p247 = por %p245, %p246
      %p248 = scmp.ne.s32.totalorder %s236, %s237
      %p249 = scmp.eq.s32.totalorder %s38, 1
      %p250 = por %p248, %p249
      %p252 = scmp.ne.s32.totalorder %s237, %s251
      %p253 = scmp.eq.s32.totalorder %s38, 0
      %p254 = por %p252, %p253
      %s256 = sadd.s32 %s255, 1
      %p259 = scmp.eq.s32.totalorder %s32, 1
      %p260 = scmp.ne.s32.totalorder %s255, %s257
      %p261 = scmp.eq.s32.totalorder %s32, 0
      %p262 = por %p260, %p261
      %p263 = scmp.ne.s32.totalorder %s255, %s257
      %p264 = scmp.eq.s32.totalorder %s37, 1
      %p265 = por %p263, %p264
      %p266 = scmp.ne.s32.totalorder %s257, %s258
      %p267 = scmp.eq.s32.totalorder %s37, 0
      %p268 = por %p266, %p267
      %p269 = scmp.ne.s32.totalorder %s257, %s258
      %p270 = scmp.eq.s32.totalorder %s38, 1
      %p271 = por %p269, %p270
      %p273 = scmp.ne.s32.totalorder %s258, %s272
      %p274 = scmp.eq.s32.totalorder %s38, 0
      %p275 = por %p273, %p274
      %s276 = ssub.s32 %s39, %s51
      %s277 = ssub.s32 %s40, %s47
      %s278 = sor.u32 %s276, %s277
      %p279 = scmp.eq.s32.totalorder %s278, 0
      %s281 = sadd.s32 %s280, 1
      %s282 = scalar_select %p279, %s280, %s281
      %p285 = pneg %p279
      %p286 = scmp.eq.s32.totalorder %s32, 1
      %p287 = por %p285, %p286
      %p288 = scmp.ne.s32.totalorder %s280, %s283
      %p289 = scmp.eq.s32.totalorder %s32, 0
      %p290 = por %p288, %p289
      %p291 = scmp.ne.s32.totalorder %s280, %s283
      %p292 = scmp.eq.s32.totalorder %s37, 1
      %p293 = por %p291, %p292
      %p294 = scmp.ne.s32.totalorder %s283, %s284
      %p295 = scmp.eq.s32.totalorder %s37, 0
      %p296 = por %p294, %p295
      %p297 = scmp.ne.s32.totalorder %s283, %s284
      %p298 = scmp.eq.s32.totalorder %s38, 1
      %p299 = por %p297, %p298
      %p301 = scmp.ne.s32.totalorder %s284, %s300
      %p302 = scmp.eq.s32.totalorder %s38, 0
      %p303 = por %p301, %p302
      %s304 = ssub.s32 %s39, %s51
      %s305 = ssub.s32 %s40, %s47
      %s306 = sor.u32 %s304, %s305
      %p307 = scmp.eq.s32.totalorder %s306, 0
      %s309 = sadd.s32 %s308, 1
      %s310 = scalar_select %p307, %s308, %s309
      %p313 = pneg %p307
      %p314 = scmp.eq.s32.totalorder %s32, 1
      %p315 = por %p313, %p314
      %p316 = scmp.ne.s32.totalorder %s308, %s311
      %p317 = scmp.eq.s32.totalorder %s32, 0
      %p318 = por %p316, %p317
      %p319 = scmp.ne.s32.totalorder %s308, %s311
      %p320 = scmp.eq.s32.totalorder %s37, 1
      %p321 = por %p319, %p320
      %p322 = scmp.ne.s32.totalorder %s311, %s312
      %p323 = scmp.eq.s32.totalorder %s37, 0
      %p324 = por %p322, %p323
      %p325 = scmp.ne.s32.totalorder %s311, %s312
      %p326 = scmp.eq.s32.totalorder %s38, 1
      %p327 = por %p325, %p326
      %p329 = scmp.ne.s32.totalorder %s312, %s328
      %p330 = scmp.eq.s32.totalorder %s38, 0
      %p331 = por %p329, %p330
      %s332 = ssub.s32 %s39, %s51
      %s333 = ssub.s32 %s40, %s47
      %s334 = sor.u32 %s332, %s333
      %p335 = scmp.eq.s32.totalorder %s334, 0
      %s337 = sadd.s32 %s336, 1
      %s338 = scalar_select %p335, %s336, %s337
      %p341 = pneg %p335
      %p342 = scmp.eq.s32.totalorder %s32, 1
      %p343 = por %p341, %p342
      %p344 = scmp.ne.s32.totalorder %s336, %s339
      %p345 = scmp.eq.s32.totalorder %s32, 0
      %p346 = por %p344, %p345
      %p347 = scmp.ne.s32.totalorder %s336, %s339
      %p348 = scmp.eq.s32.totalorder %s37, 1
      %p349 = por %p347, %p348
      %p350 = scmp.ne.s32.totalorder %s339, %s340
      %p351 = scmp.eq.s32.totalorder %s37, 0
      %p352 = por %p350, %p351
      %p353 = scmp.ne.s32.totalorder %s339, %s340
      %p354 = scmp.eq.s32.totalorder %s38, 1
      %p355 = por %p353, %p354
      %p357 = scmp.ne.s32.totalorder %s340, %s356
      %p358 = scmp.eq.s32.totalorder %s38, 0
      %p359 = por %p357, %p358
      %p360 = scmp.le.s32.totalorder 1, %s32
      %p361 = scmp.lt.s32.totalorder %s32, 3
      %p362 = pnand %p360, %p361
      %p363 = pneg %p362
      // Predicated region
      $region9: #{tpu_custom_call.1} parent=5 // pred_check
        _
      $region10: #{tpu_custom_call.1} parent=5 // pred_check_branch
        %365 = sbr.rel (%p362) target = $region12
      $region11: #{tpu_custom_call.1} parent=5 // pred_region
        %s366 = ssub.s32 %s32, 1
        // Predicated region
        $region13: #{tpu_custom_call.1} parent=11 // pred_check
          %p367 = pneg %p121
        $region14: #{tpu_custom_call.1} parent=11 // pred_check_branch
          %369 = sbr.rel (%p367) target = $region16
        $region15: #{tpu_custom_call.1} parent=11 // pred_region
          _
        $region16: #{tpu_custom_call.1} parent=11 // pred_fallthru
          _
        // Predicated region
        $region17: #{tpu_custom_call.1} parent=11 // pred_check
          %p370 = pneg %p142
        $region18: #{tpu_custom_call.1} parent=11 // pred_check_branch
          %372 = sbr.rel (%p370) target = $region20
        $region19: #{tpu_custom_call.1} parent=11 // pred_region
          _
        $region20: #{tpu_custom_call.1} parent=11 // pred_fallthru
          _
        // Predicated region
        $region21: #{tpu_custom_call.1} parent=11 // pred_check
          %p373 = pneg %p163
        $region22: #{tpu_custom_call.1} parent=11 // pred_check_branch
          %375 = sbr.rel (%p373) target = $region24
        $region23: #{tpu_custom_call.1} parent=11 // pred_region
          %s377 = ssub.s32 256, 256
          %378 = vsyncadd [#allocation6], %s377
          %s379 = sshll.u32 [#allocation7], 4
          %s380 = int_to_ptr.vmem [resolvable:$true] %s379
          %385 = dma.hbm_to_vmem [thread:$0]  %s4, 256, %s380, [#allocation6], 64, 64, 4
        $region24: #{tpu_custom_call.1} parent=11 // pred_fallthru
          _
        // Predicated region
        $region25: #{tpu_custom_call.1} parent=11 // pred_check
          %p386 = pneg %p184
        $region26: #{tpu_custom_call.1} parent=11 // pred_check_branch
          %388 = sbr.rel (%p386) target = $region28
        $region27: #{tpu_custom_call.1} parent=11 // pred_region
          _
        $region28: #{tpu_custom_call.1} parent=11 // pred_fallthru
          _
        // Predicated region
        $region29: #{tpu_custom_call.1} parent=11 // pred_check
          %p389 = pneg %p205
        $region30: #{tpu_custom_call.1} parent=11 // pred_check_branch
          %391 = sbr.rel (%p389) target = $region32
        $region31: #{tpu_custom_call.1} parent=11 // pred_region
          %s393 = ssub.s32 256, 256
          %394 = vsyncadd [#allocation9], %s393
          %s395 = sshll.u32 [#allocation8], 4
          %s396 = int_to_ptr.vmem [resolvable:$true] %s395
          %401 = dma.hbm_to_vmem [thread:$0]  %s6, 256, %s396, [#allocation9], 64, 64, 4
        $region32: #{tpu_custom_call.1} parent=11 // pred_fallthru
          _
        // Predicated region
        $region33: #{tpu_custom_call.1} parent=11 // pred_check
          %p402 = pneg %p226
        $region34: #{tpu_custom_call.1} parent=11 // pred_check_branch
          %404 = sbr.rel (%p402) target = $region36
        $region35: #{tpu_custom_call.1} parent=11 // pred_region
          _
        $region36: #{tpu_custom_call.1} parent=11 // pred_fallthru
          _
        // Predicated region
        $region37: #{tpu_custom_call.1} parent=11 // pred_check
          %p405 = pneg %p247
        $region38: #{tpu_custom_call.1} parent=11 // pred_check_branch
          %407 = sbr.rel (%p405) target = $region40
        $region39: #{tpu_custom_call.1} parent=11 // pred_region
          %s409 = ssub.s32 256, 256
          %410 = vsyncadd [#allocation9], %s409
          %s411 = sshll.u32 [#allocation10], 4
          %s412 = int_to_ptr.vmem [resolvable:$true] %s411
          %417 = dma.hbm_to_vmem [thread:$0]  %s8, 256, %s412, [#allocation9], 64, 64, 4
        $region40: #{tpu_custom_call.1} parent=11 // pred_fallthru
          _
        // Predicated region
        $region41: #{tpu_custom_call.1} parent=11 // pred_check
          %p418 = pneg %p268
        $region42: #{tpu_custom_call.1} parent=11 // pred_check_branch
          %420 = sbr.rel (%p418) target = $region44
        $region43: #{tpu_custom_call.1} parent=11 // pred_region
          _
        $region44: #{tpu_custom_call.1} parent=11 // pred_fallthru
          _
      $region12: #{tpu_custom_call.1} parent=5 // pred_fallthru
        _
      %p421 = scmp.lt.s32.totalorder %s32, 2
      // Predicated region
      $region45: #{tpu_custom_call.1} parent=5 // pred_check
        %p422 = pneg %p421
      $region46: #{tpu_custom_call.1} parent=5 // pred_check_branch
        %424 = sbr.rel (%p422) target = $region48
      $region47: #{tpu_custom_call.1} parent=5 // pred_region
        // Predicated region
        $region49: #{tpu_custom_call.1} parent=47 // pred_check
          %p425 = pneg %p66
        $region50: #{tpu_custom_call.1} parent=47 // pred_check_branch
          %427 = sbr.rel (%p425) target = $region52
        $region51: #{tpu_custom_call.1} parent=47 // pred_region
          %s428 = sand.u32 %s56, 1
          %s429 = scalar_lea.sflag [#allocation3], %s428
          %s430 = sand.u32 %s56, 1
          %s431 = smul.addr %s430, 8
          %s432 = scalar_lea.vmem [#allocation2], %s431
          %s434 = ssub.s32 128, 128
          %435 = vsyncadd %s429, %s434
          %s436 = sadd.s32 %s40, %s39
          %s437 = smul.addr %s436, 128
          %s438 = scalar_lea.hbm %s0, %s437
          %s440 = sshll.u32 %s432, 4
          %s441 = int_to_ptr.vmem [resolvable:$true] %s440
          %443 = dma.hbm_to_vmem [thread:$0]  %s438, 128, %s441, %s429
        $region52: #{tpu_custom_call.1} parent=47 // pred_fallthru
          _
        // Predicated region
        $region53: #{tpu_custom_call.1} parent=47 // pred_check
          %p444 = pneg %p94
        $region54: #{tpu_custom_call.1} parent=47 // pred_check_branch
          %446 = sbr.rel (%p444) target = $region56
        $region55: #{tpu_custom_call.1} parent=47 // pred_region
          %s447 = sand.u32 %s32, 1
          %s448 = scalar_lea.sflag [#allocation6], %s447
          %s449 = sand.u32 %s84, 1
          %s450 = smul.addr %s449, 8
          %s451 = scalar_lea.vmem [#allocation5], %s450
          %s453 = ssub.s32 128, 128
          %454 = vsyncadd %s448, %s453
          %s455 = sadd.s32 %s40, %s39
          %s456 = smul.addr %s455, 128
          %s457 = scalar_lea.hbm %s1, %s456
          %s459 = sshll.u32 %s451, 4
          %s460 = int_to_ptr.vmem [resolvable:$true] %s459
          %462 = dma.hbm_to_vmem [thread:$0]  %s457, 128, %s460, %s448
        $region56: #{tpu_custom_call.1} parent=47 // pred_fallthru
          _
      $region48: #{tpu_custom_call.1} parent=5 // pred_fallthru
        _
      %p463 = scmp.le.s32.totalorder 1, %s32
      %p464 = scmp.lt.s32.totalorder %s32, 3
      %p465 = pnand %p463, %p464
      %p466 = pneg %p465
      // Predicated region
      $region57: #{tpu_custom_call.1} parent=5 // pred_check
        _
      $region58: #{tpu_custom_call.1} parent=5 // pred_check_branch
        %468 = sbr.rel (%p465) target = $region60
      $region59: #{tpu_custom_call.1} parent=5 // pred_region
        %s469 = ssub.s32 %s32, 1
        %s470 = sand.u32 %s59, 1
        %s471 = scalar_lea.sflag [#allocation3], %s470
        %s472 = sand.u32 %s59, 1
        %s473 = smul.addr %s472, 8
        %s474 = scalar_lea.vmem [#allocation2], %s473
        // Predicated region
        $region61: #{tpu_custom_call.1} parent=59 // pred_check
          %p475 = pneg %p72
        $region62: #{tpu_custom_call.1} parent=59 // pred_check_branch
          %477 = sbr.rel (%p475) target = $region64
        $region63: #{tpu_custom_call.1} parent=59 // pred_region
          %478 = dma.done %s471, 128
        $region64: #{tpu_custom_call.1} parent=59 // pred_fallthru
          _
        %s479 = sand.u32 %s37, 1
        %s480 = scalar_lea.sflag [#allocation6], %s479
        %s481 = sand.u32 %s87, 1
        %s482 = smul.addr %s481, 8
        %s483 = scalar_lea.vmem [#allocation5], %s482
        // Predicated region
        $region65: #{tpu_custom_call.1} parent=59 // pred_check
          %p484 = pneg %p100
        $region66: #{tpu_custom_call.1} parent=59 // pred_check_branch
          %486 = sbr.rel (%p484) target = $region68
        $region67: #{tpu_custom_call.1} parent=59 // pred_region
          %487 = dma.done %s480, 128
        $region68: #{tpu_custom_call.1} parent=59 // pred_fallthru
          _
        // Predicated region
        $region69: #{tpu_custom_call.1} parent=59 // pred_check
          %p488 = pneg %p163
        $region70: #{tpu_custom_call.1} parent=59 // pred_check_branch
          %490 = sbr.rel (%p488) target = $region72
        $region71: #{tpu_custom_call.1} parent=59 // pred_region
          %491 = dma.done [#allocation6], 256
        $region72: #{tpu_custom_call.1} parent=59 // pred_fallthru
          _
        // Predicated region
        $region73: #{tpu_custom_call.1} parent=59 // pred_check
          %p492 = pneg %p205
        $region74: #{tpu_custom_call.1} parent=59 // pred_check_branch
          %494 = sbr.rel (%p492) target = $region76
        $region75: #{tpu_custom_call.1} parent=59 // pred_region
          %495 = dma.done [#allocation9], 256
        $region76: #{tpu_custom_call.1} parent=59 // pred_fallthru
          _
        // Predicated region
        $region77: #{tpu_custom_call.1} parent=59 // pred_check
          %p496 = pneg %p247
        $region78: #{tpu_custom_call.1} parent=59 // pred_check_branch
          %498 = sbr.rel (%p496) target = $region80
        $region79: #{tpu_custom_call.1} parent=59 // pred_region
          %499 = dma.done [#allocation9], 256
        $region80: #{tpu_custom_call.1} parent=59 // pred_fallthru
          _
        %s500 = sand.u32 %s59, 1
        %s501 = scalar_lea.sflag [#allocation3], %s500
        %s502 = sand.u32 %s59, 1
        %s503 = smul.addr %s502, 8
        %s504 = scalar_lea.vmem [#allocation2], %s503
        %p505 = pneg %p72
        %p506 = pneg %p69
        %s507 = sand.u32 %s37, 1
        %s508 = scalar_lea.sflag [#allocation6], %s507
        %s509 = sand.u32 %s87, 1
        %s510 = smul.addr %s509, 8
        %s511 = scalar_lea.vmem [#allocation5], %s510
        %p512 = pneg %p100
        %p513 = pneg %p97
        %p514 = pneg %p121
        %p515 = pneg %p118
        %p516 = pneg %p142
        %p517 = pneg %p139
        %p518 = pneg %p163
        %p519 = pneg %p160
        %p520 = pneg %p184
        %p521 = pneg %p181
        %p522 = pneg %p205
        %p523 = pneg %p202
        %p524 = pneg %p226
        %p525 = pneg %p223
        %p526 = pneg %p247
        %p527 = pneg %p244
        %p528 = pneg %p268
        %p529 = pneg %p265
        %p530 = pneg %p296
        %p531 = pneg %p293
        %s532 = sand.u32 %s283, 1
        %s533 = scalar_lea.sflag [#allocation4], %s532
        %s534 = sand.u32 %s283, 1
        %s535 = smul.addr %s534, 4
        %s536 = scalar_lea.vmem [#allocation11], %s535
        %p537 = pneg %p324
        %p538 = pneg %p321
        %s539 = sand.u32 %s37, 1
        %s540 = scalar_lea.sflag [#allocation13], %s539
        %s541 = sand.u32 %s311, 1
        %s542 = smul.addr %s541, 4
        %s543 = scalar_lea.vmem [#allocation12], %s542
        %p544 = pneg %p352
        %p545 = pneg %p349
        %s546 = sand.u32 %s37, 1
        %s547 = scalar_lea.sflag [#allocation13], %s546
        %s548 = sand.u32 %s339, 1
        %s549 = smul.addr %s548, 4
        %s550 = scalar_lea.vmem [#allocation14], %s549
        %v552 = vld [vmem:[%s474] sm:$0xff]
        %v553 = vld [vmem:[%s483] sm:$0xff]
        %v554 = vadd.f32 %v552, %v553
        %v555 = vld [vmem:[%s2] sm:$0x1]
        %v556 = vld [vmem:[%s3] sm:$0x1]
        %vm557 = vcmask 261120
        %v558 = vsel %vm557, %v554, 0.0
        %559 = vadd.xlane.f32.xlu0 %v558
        %v560 = vpop.xlane.xlu0 %559
        %v561 = vrcp.pop 32.0
        %v562 = vmul.f32 %v560, %v561
        %v563 = vsub.f32 %v554, %v562
        %v564 = vmul.f32 %v563, %v563
        %v565 = vsel %vm557, %v564, 0.0
        %566 = vadd.xlane.f32.xlu0 %v565
        %v567 = vpop.xlane.xlu0 %566
        %v568 = vmul.f32 %v567, %v561
        %v569 = vadd.f32 %v568, 1e-05
        %v570 = vrsqrt.pop %v569
        %v571 = vmul.f32 %v563, %v570
        %v573 = vlaneseq
        %v574 = vshrl.u32 %v573, 7
        %v575 = vsub.s32 0, %v574
        %v576 = vrot.slane %v555, %v575
        %v578 = vmul.f32 %v571, %v576
        %v580 = vlaneseq
        %v581 = vshrl.u32 %v580, 7
        %v582 = vsub.s32 0, %v581
        %v583 = vrot.slane %v556, %v582
        %v585 = vadd.f32 %v578, %v583
        %v586 = vpack.c.bf16 %v585, %v585
        %v587 = vld [vmem:[#allocation7] sm:$0xf]
        %v588 = vld [vmem:[#allocation7 + $0x4] sm:$0xf]
        %v589 = vld [vmem:[#allocation7 + $0x8] sm:$0xf]
        %v590 = vld [vmem:[#allocation7 + $0xc] sm:$0xf]
        %v591 = vld [vmem:[%s5] sm:$0x1]
        %v593 = vlaneseq
        %v594 = vshrl.u32 %v593, 7
        %v595 = vsub.s32 0, %v594
        %v596 = vrot.slane %v591, %v595
        %v602 = vunpack.c.l.b16 %v587
        %v603 = vunpack.c.l.b16 %v588
        %v604 = vunpack.c.l.b16 %v589
        %v605 = vunpack.c.l.b16 %v590
        %v606 = vpack.c.b16 %v603, %v602
        %v607 = vpack.c.b16 %v605, %v604
        %v611 = vsel %vm557, %v586, 0
        %613 = vmatprep.subr.bf16.mxu0 0
        %614 = vmatpush1.bf16.msra.mxu0 0
        %615 = vmatprep.subr.bf16.mxu0 0
        %616 = vmatpush1.bf16.msra.mxu0 0
        %617 = vmatprep.subr.bf16.mxu0 0
        %618 = vmatpush1.bf16.msra.mxu0 0
        %619 = vmatprep.subr.bf16.mxu0 0
        %620 = vmatpush1.bf16.msra.mxu0 0
        %621 = vmatprep.subr.bf16.mxu0 0
        %622 = vmatpush1.bf16.msra.mxu0 0
        %623 = vmatprep.subr.bf16.mxu0 0
        %624 = vmatpush1.bf16.msra.mxu0 0
        %625 = vmatprep.subr.bf16.mxu0 0
        %626 = vmatpush1.bf16.msra.mxu0 %v607
        %627 = vmatprep.subr.bf16.mxu0 0
        %628 = vmatpush1.bf16.msra.mxu0 %v606
        %629 = vmatprep.subr.bf16.mxu0 0
        %630 = vmatpush2.bf16.msra.mxu0 0
        %631 = vmatprep.subr.bf16.mxu0 0
        %632 = vmatpush2.bf16.msra.mxu0 0
        %633 = vmatprep.subr.bf16.mxu0 0
        %634 = vmatpush2.bf16.msra.mxu0 0
        %635 = vmatprep.subr.bf16.mxu0 0
        %636 = vmatpush2.bf16.msra.mxu0 0
        %637 = vmatprep.subr.bf16.mxu0 0
        %638 = vmatpush2.bf16.msra.mxu0 0
        %639 = vmatprep.subr.bf16.mxu0 0
        %640 = vmatpush2.bf16.msra.mxu0 0
        %641 = vmatprep.subr.bf16.mxu0 0
        %642 = vmatpush2.bf16.msra.mxu0 0
        %643 = vmatprep.subr.bf16.mxu0 0
        %644 = vmatpush2.bf16.msra.mxu0 0
        %645 = vmatprep.mubr.bf16.mxu0 0
        %646 = vmatmul.mubr.bf16.gmra.mxu0 %v611
        %v647 = vpop.f32.mrf.mxu0
        %v648 = vadd.f32 %v596, %v647
        %v649 = vpop.f32.mrf.mxu0
        %v650 = vpop.f32.mrf.mxu0
        %v651 = vpop.f32.mrf.mxu0
        %652 = vdwg.mxu0
        %v653 = vmul.f32 %v648, 0.35355338
        %v654 = vld [vmem:[#allocation8] sm:$0xf]
        %v655 = vld [vmem:[#allocation8 + $0x4] sm:$0xf]
        %v656 = vld [vmem:[#allocation8 + $0x8] sm:$0xf]
        %v657 = vld [vmem:[#allocation8 + $0xc] sm:$0xf]
        %v658 = vld [vmem:[%s7] sm:$0x1]
        %v660 = vlaneseq
        %v661 = vshrl.u32 %v660, 7
        %v662 = vsub.s32 0, %v661
        %v663 = vrot.slane %v658, %v662
        %v669 = vunpack.c.l.b16 %v654
        %v670 = vunpack.c.l.b16 %v655
        %v671 = vunpack.c.l.b16 %v656
        %v672 = vunpack.c.l.b16 %v657
        %v673 = vpack.c.b16 %v670, %v669
        %v674 = vpack.c.b16 %v672, %v671
        %677 = vmatprep.subr.bf16.mxu0 0
        %678 = vmatpush1.bf16.msra.mxu0 0
        %679 = vmatprep.subr.bf16.mxu0 0
        %680 = vmatpush1.bf16.msra.mxu0 0
        %681 = vmatprep.subr.bf16.mxu0 0
        %682 = vmatpush1.bf16.msra.mxu0 0
        %683 = vmatprep.subr.bf16.mxu0 0
        %684 = vmatpush1.bf16.msra.mxu0 0
        %685 = vmatprep.subr.bf16.mxu0 0
        %686 = vmatpush1.bf16.msra.mxu0 0
        %687 = vmatprep.subr.bf16.mxu0 0
        %688 = vmatpush1.bf16.msra.mxu0 0
        %689 = vmatprep.subr.bf16.mxu0 0
        %690 = vmatpush1.bf16.msra.mxu0 %v674
        %691 = vmatprep.subr.bf16.mxu0 0
        %692 = vmatpush1.bf16.msra.mxu0 %v673
        %693 = vmatprep.subr.bf16.mxu0 0
        %694 = vmatpush2.bf16.msra.mxu0 0
        %695 = vmatprep.subr.bf16.mxu0 0
        %696 = vmatpush2.bf16.msra.mxu0 0
        %697 = vmatprep.subr.bf16.mxu0 0
        %698 = vmatpush2.bf16.msra.mxu0 0
        %699 = vmatprep.subr.bf16.mxu0 0
        %700 = vmatpush2.bf16.msra.mxu0 0
        %701 = vmatprep.subr.bf16.mxu0 0
        %702 = vmatpush2.bf16.msra.mxu0 0
        %703 = vmatprep.subr.bf16.mxu0 0
        %704 = vmatpush2.bf16.msra.mxu0 0
        %705 = vmatprep.subr.bf16.mxu0 0
        %706 = vmatpush2.bf16.msra.mxu0 0
        %707 = vmatprep.subr.bf16.mxu0 0
        %708 = vmatpush2.bf16.msra.mxu0 0
        %709 = vmatprep.mubr.bf16.mxu0 0
        %710 = vmatmul.mubr.bf16.gmra.mxu0 %v611
        %v711 = vpop.f32.mrf.mxu0
        %v712 = vadd.f32 %v663, %v711
        %v713 = vpop.f32.mrf.mxu0
        %v714 = vpop.f32.mrf.mxu0
        %v715 = vpop.f32.mrf.mxu0
        %716 = vdwg.mxu0
        %v717 = vld [vmem:[#allocation10] sm:$0xf]
        %v718 = vld [vmem:[#allocation10 + $0x4] sm:$0xf]
        %v719 = vld [vmem:[#allocation10 + $0x8] sm:$0xf]
        %v720 = vld [vmem:[#allocation10 + $0xc] sm:$0xf]
        %v721 = vld [vmem:[%s9] sm:$0x1]
        %v723 = vlaneseq
        %v724 = vshrl.u32 %v723, 7
        %v725 = vsub.s32 0, %v724
        %v726 = vrot.slane %v721, %v725
        %v732 = vunpack.c.l.b16 %v717
        %v733 = vunpack.c.l.b16 %v718
        %v734 = vunpack.c.l.b16 %v719
        %v735 = vunpack.c.l.b16 %v720
        %v736 = vpack.c.b16 %v733, %v732
        %v737 = vpack.c.b16 %v735, %v734
        %740 = vmatprep.subr.bf16.mxu0 0
        %741 = vmatpush1.bf16.msra.mxu0 0
        %742 = vmatprep.subr.bf16.mxu0 0
        %743 = vmatpush1.bf16.msra.mxu0 0
        %744 = vmatprep.subr.bf16.mxu0 0
        %745 = vmatpush1.bf16.msra.mxu0 0
        %746 = vmatprep.subr.bf16.mxu0 0
        %747 = vmatpush1.bf16.msra.mxu0 0
        %748 = vmatprep.subr.bf16.mxu0 0
        %749 = vmatpush1.bf16.msra.mxu0 0
        %750 = vmatprep.subr.bf16.mxu0 0
        %751 = vmatpush1.bf16.msra.mxu0 0
        %752 = vmatprep.subr.bf16.mxu0 0
        %753 = vmatpush1.bf16.msra.mxu0 %v737
        %754 = vmatprep.subr.bf16.mxu0 0
        %755 = vmatpush1.bf16.msra.mxu0 %v736
        %756 = vmatprep.subr.bf16.mxu0 0
        %757 = vmatpush2.bf16.msra.mxu0 0
        %758 = vmatprep.subr.bf16.mxu0 0
        %759 = vmatpush2.bf16.msra.mxu0 0
        %760 = vmatprep.subr.bf16.mxu0 0
        %761 = vmatpush2.bf16.msra.mxu0 0
        %762 = vmatprep.subr.bf16.mxu0 0
        %763 = vmatpush2.bf16.msra.mxu0 0
        %764 = vmatprep.subr.bf16.mxu0 0
        %765 = vmatpush2.bf16.msra.mxu0 0
        %766 = vmatprep.subr.bf16.mxu0 0
        %767 = vmatpush2.bf16.msra.mxu0 0
        %768 = vmatprep.subr.bf16.mxu0 0
        %769 = vmatpush2.bf16.msra.mxu0 0
        %770 = vmatprep.subr.bf16.mxu0 0
        %771 = vmatpush2.bf16.msra.mxu0 0
        %772 = vmatprep.mubr.bf16.mxu0 0
        %773 = vmatmul.mubr.bf16.gmra.mxu0 %v611
        %v774 = vpop.f32.mrf.mxu0
        %v775 = vadd.f32 %v726, %v774
        %v776 = vpop.f32.mrf.mxu0
        %v777 = vpop.f32.mrf.mxu0
        %v778 = vpop.f32.mrf.mxu0
        %779 = vdwg.mxu0
        %v780 = vpack.c.bf16 %v653, %v653
        %vm781 = vcmask 257024
        %782 = vst.msk [vmem:[%s536] sm:$0xf] %vm781, %v780
        %v783 = vpack.c.bf16 %v712, %v712
        %784 = vst.msk [vmem:[%s543] sm:$0xf] %vm781, %v783
        %v785 = vpack.c.bf16 %v775, %v775
        %786 = vst.msk [vmem:[%s550] sm:$0xf] %vm781, %v785
        %s787 = sand.u32 %s283, 1
        %s788 = scalar_lea.sflag [#allocation4], %s787
        %s789 = sand.u32 %s283, 1
        %s790 = smul.addr %s789, 4
        %s791 = scalar_lea.vmem [#allocation11], %s790
        %s792 = sand.u32 %s37, 1
        %s793 = scalar_lea.sflag [#allocation13], %s792
        %s794 = sand.u32 %s311, 1
        %s795 = smul.addr %s794, 4
        %s796 = scalar_lea.vmem [#allocation12], %s795
        %s797 = sand.u32 %s37, 1
        %s798 = scalar_lea.sflag [#allocation13], %s797
        %s799 = sand.u32 %s339, 1
        %s800 = smul.addr %s799, 4
        %s801 = scalar_lea.vmem [#allocation14], %s800
        // Predicated region
        $region81: #{tpu_custom_call.1} parent=59 // pred_check
          %p802 = pneg %p293
        $region82: #{tpu_custom_call.1} parent=59 // pred_check_branch
          %804 = sbr.rel (%p802) target = $region84
        $region83: #{tpu_custom_call.1} parent=59 // pred_region
          %s806 = ssub.s32 64, 64
          %807 = vsyncadd %s788, %s806
          %s808 = sadd.s32 %s42, %s41
          %s809 = smul.addr %s808, 64
          %s810 = scalar_lea.hbm %s10, %s809
          %s812 = sshll.u32 %s791, 4
          %s813 = int_to_ptr.vmem [resolvable:$true] %s812
          %815 = dma.vmem_to_hbm [thread:$0]  %s813, 64, %s810, %s788
        $region84: #{tpu_custom_call.1} parent=59 // pred_fallthru
          _
        // Predicated region
        $region85: #{tpu_custom_call.1} parent=59 // pred_check
          %p816 = pneg %p321
        $region86: #{tpu_custom_call.1} parent=59 // pred_check_branch
          %818 = sbr.rel (%p816) target = $region88
        $region87: #{tpu_custom_call.1} parent=59 // pred_region
          %s820 = ssub.s32 64, 64
          %821 = vsyncadd %s793, %s820
          %s822 = sadd.s32 %s42, %s41
          %s823 = smul.addr %s822, 64
          %s824 = scalar_lea.hbm %s11, %s823
          %s826 = sshll.u32 %s796, 4
          %s827 = int_to_ptr.vmem [resolvable:$true] %s826
          %829 = dma.vmem_to_hbm [thread:$0]  %s827, 64, %s824, %s793
        $region88: #{tpu_custom_call.1} parent=59 // pred_fallthru
          _
        // Predicated region
        $region89: #{tpu_custom_call.1} parent=59 // pred_check
          %p830 = pneg %p349
        $region90: #{tpu_custom_call.1} parent=59 // pred_check_branch
          %832 = sbr.rel (%p830) target = $region92
        $region91: #{tpu_custom_call.1} parent=59 // pred_region
          %s834 = ssub.s32 64, 64
          %835 = vsyncadd %s798, %s834
          %s836 = sadd.s32 %s42, %s41
          %s837 = smul.addr %s836, 64
          %s838 = scalar_lea.hbm %s12, %s837
          %s840 = sshll.u32 %s801, 4
          %s841 = int_to_ptr.vmem [resolvable:$true] %s840
          %843 = dma.vmem_to_hbm [thread:$0]  %s841, 64, %s838, %s798
        $region92: #{tpu_custom_call.1} parent=59 // pred_fallthru
          _
      $region60: #{tpu_custom_call.1} parent=5 // pred_fallthru
        _
      %p844 = scmp.le.s32.totalorder 2, %s32
      // Predicated region
      $region93: #{tpu_custom_call.1} parent=5 // pred_check
        %p845 = pneg %p844
      $region94: #{tpu_custom_call.1} parent=5 // pred_check_branch
        %847 = sbr.rel (%p845) target = $region96
      $region95: #{tpu_custom_call.1} parent=5 // pred_region
        %s848 = ssub.s32 %s32, 2
        // Predicated region
        $region97: #{tpu_custom_call.1} parent=95 // pred_check
          %p849 = pneg %p299
        $region98: #{tpu_custom_call.1} parent=95 // pred_check_branch
          %851 = sbr.rel (%p849) target = $region100
        $region99: #{tpu_custom_call.1} parent=95 // pred_region
          %s852 = sand.u32 %s284, 1
          %s853 = scalar_lea.sflag [#allocation4], %s852
          %s854 = sand.u32 %s284, 1
          %s855 = smul.addr %s854, 4
          %s856 = scalar_lea.vmem [#allocation11], %s855
          %857 = dma.done %s853, 64
        $region100: #{tpu_custom_call.1} parent=95 // pred_fallthru
          _
        // Predicated region
        $region101: #{tpu_custom_call.1} parent=95 // pred_check
          %p858 = pneg %p327
        $region102: #{tpu_custom_call.1} parent=95 // pred_check_branch
          %860 = sbr.rel (%p858) target = $region104
        $region103: #{tpu_custom_call.1} parent=95 // pred_region
          %s861 = sand.u32 %s38, 1
          %s862 = scalar_lea.sflag [#allocation13], %s861
          %s863 = sand.u32 %s312, 1
          %s864 = smul.addr %s863, 4
          %s865 = scalar_lea.vmem [#allocation12], %s864
          %866 = dma.done %s862, 64
        $region104: #{tpu_custom_call.1} parent=95 // pred_fallthru
          _
        // Predicated region
        $region105: #{tpu_custom_call.1} parent=95 // pred_check
          %p867 = pneg %p355
        $region106: #{tpu_custom_call.1} parent=95 // pred_check_branch
          %869 = sbr.rel (%p867) target = $region108
        $region107: #{tpu_custom_call.1} parent=95 // pred_region
          %s870 = sand.u32 %s38, 1
          %s871 = scalar_lea.sflag [#allocation13], %s870
          %s872 = sand.u32 %s340, 1
          %s873 = smul.addr %s872, 4
          %s874 = scalar_lea.vmem [#allocation14], %s873
          %875 = dma.done %s871, 64
        $region108: #{tpu_custom_call.1} parent=95 // pred_fallthru
          _
      $region96: #{tpu_custom_call.1} parent=5 // pred_fallthru
        _
    $region6: #{tpu_custom_call.1} parent=1 // loop_footer
      %s36 = sadd.s32 1, %s32
    $region7: #{tpu_custom_call.1} parent=1 // loop_footer_branch
      %31 = sbr.rel target = $region3
    $region8: #{tpu_custom_call.1} parent=1 // loop_exit
      _
    %876 = vsyncpa [#allocation3], 1
    %s877 = scalar_lea.sflag [#allocation3], 1
    %878 = vsyncpa %s877, 1
    %879 = vsyncpa [#allocation6], 1
    %s880 = scalar_lea.sflag [#allocation6], 1
    %881 = vsyncpa %s880, 1
    %882 = vsyncpa [#allocation9], 1
    %883 = vsyncpa [#allocation4], 1
    %s884 = scalar_lea.sflag [#allocation4], 1
    %885 = vsyncpa %s884, 1
    %886 = vsyncpa [#allocation13], 1
    %s887 = scalar_lea.sflag [#allocation13], 1
    %888 = vsyncpa %s887, 1

</llo_original>
